<compile_context>
chip_gen: v7x
topology: tpu7x:2x2x1
jax: 0.10.0
libtpu: 0.0.40
codegen_flags: <defaults>
</compile_context>

<pallas_src>
import jax
import jax.numpy as jnp
from jax import lax
from jax.experimental import pallas as pl
from jax.experimental.pallas import tpu as pltpu


def _round_up(x, m):
    return ((x + m - 1) // m) * m


# -----------------------------------------------------------------------------
# Kernel: fused Linear (matmul + bias) on one batch tile.
# -----------------------------------------------------------------------------
def _linear_kernel(x_ref, w_ref, b_ref, o_ref):
    # x_ref: (bt, D_in)   w_ref: (D_in, D_out)   b_ref: (1, D_out)
    # o_ref: (bt, D_out)
    acc = jnp.dot(x_ref[...], w_ref[...], preferred_element_type=jnp.float32)
    o_ref[...] = (acc + b_ref[...]).astype(o_ref.dtype)


def linear_pallas(x, w_in_out, bias_2d, *, max_block_b=2048):
    """y = x @ w_in_out + bias, one fused Pallas call.

    x:        (B, D_in)      float32
    w_in_out: (D_in, D_out)  float32  (== torch weight.T)
    bias_2d:  (1, D_out)     float32
    returns   (B, D_out)     float32
    """
    B, D_in = x.shape
    D_in_w, D_out = w_in_out.shape
    assert D_in == D_in_w
    assert bias_2d.shape == (1, D_out)

    # Choose the batch tile.  A block dim equal to the full array dim is always
    # legal, so small / unaligned batches run as one full block with no padding.
    if B <= 8 or (B % 8 != 0 and B <= max_block_b):
        bt = B
    else:
        bt = min(max_block_b, _round_up(B, 8))
        # v7x: keep >= 2 grid blocks so the "parallel" batch axis can actually
        # shard across the two TensorCores (harmless on v5e/v6e).
        if _round_up(B, bt) // bt < 2:
            bt = max(8, _round_up((B + 1) // 2, 8))
    b_p = _round_up(B, bt)

    # Batch-only padding, and only when strictly required (large unaligned B).
    x_in = x if b_p == B else jnp.pad(x, ((0, b_p - B), (0, 0)))

    grid = (b_p // bt,)
    out = pl.pallas_call(
        _linear_kernel,
        out_shape=jax.ShapeDtypeStruct((b_p, D_out), jnp.float32),
        grid=grid,
        in_specs=[
            pl.BlockSpec((bt, D_in), lambda i: (i, 0)),
            pl.BlockSpec((D_in, D_out), lambda i: (0, 0)),   # resident weight
            pl.BlockSpec((1, D_out), lambda i: (0, 0)),       # resident bias
        ],
        out_specs=pl.BlockSpec((bt, D_out), lambda i: (i, 0)),
        compiler_params=pltpu.CompilerParams(
            dimension_semantics=("parallel",)),
    )(x_in, w_in_out, bias_2d)

    return out if b_p == B else out[:B]


# -----------------------------------------------------------------------------
# Parameter setup (deterministic, synthetic) matching nn.Linear(100, 10).
# Bias is stored pre-shaped (1, 10) so the forward path does no extra reshaping.
# -----------------------------------------------------------------------------
def init_params(key):
    k_w, k_b = jax.random.split(key)
    d_in, d_out = 100, 10
    # Stored as (in, out) == torch weight.T so the kernel is a plain x @ W.
    w = jax.random.normal(k_w, (d_in, d_out), jnp.float32) * 0.1
    b = jax.random.normal(k_b, (1, d_out), jnp.float32) * 0.1
    return {"w": w, "b": b}


# -----------------------------------------------------------------------------
# Full forward pass (Pallas) and a pure-JAX reference for validation.
# -----------------------------------------------------------------------------
def label_classifier_forward(x, p):
    return linear_pallas(x, p["w"], p["b"])


def reference_forward(x, p):
    return jnp.dot(x, p["w"], precision=lax.Precision.HIGHEST) + p["b"]


if __name__ == "__main__":
    B, D_IN = 2, 100  # Linear(100, 10) implies a (B, 100) input.
    key = jax.random.PRNGKey(0)
    k_x, k_p = jax.random.split(key)
    x = jax.random.normal(k_x, (B, D_IN), jnp.float32)
    params = init_params(k_p)

    out = jax.block_until_ready(label_classifier_forward(x, params))
    assert out.shape == (B, 10), out.shape

    ref = jax.block_until_ready(reference_forward(x, params))
    max_err = float(jnp.max(jnp.abs(out - ref)))
    if not bool(jnp.allclose(out, ref, atol=1e-4, rtol=1e-4)):
        raise AssertionError(
            f"Pallas output mismatch vs reference, max abs err {max_err}")

    print("KERNEL_OK")
</pallas_src>

<mosaic_0001>
module attributes {stable_mosaic.version = 11 : i64} {
  func.func @_linear_kernel(%arg0: i32, %arg1: memref<2x100xf32, #tpu.memory_space<vmem>>, %arg2: memref<100x10xf32, #tpu.memory_space<vmem>>, %arg3: memref<1x10xf32, #tpu.memory_space<vmem>>, %arg4: memref<2x10xf32, #tpu.memory_space<vmem>>) attributes {dimension_semantics = [#tpu.dimension_semantics<parallel>], iteration_bounds = array<i64: 1>, scalar_prefetch = 0 : i64, scratch_operands = 0 : i64, tpu.core_type = #tpu.core_type<tc>, window_params = [{transform_indices = @transform_0, window_bounds = array<i64: 2, 100>}, {pipeline_mode = #tpu.pipeline_mode<synchronous>, transform_indices = @transform_1, window_bounds = array<i64: 100, 10>}, {pipeline_mode = #tpu.pipeline_mode<synchronous>, transform_indices = @transform_2, window_bounds = array<i64: 1, 10>}, {transform_indices = @transform_3, window_bounds = array<i64: 2, 10>}]} {
    %c0 = arith.constant 0 : index
    %c0_0 = arith.constant 0 : index
    %0 = vector.load %arg1[%c0, %c0_0] : memref<2x100xf32, #tpu.memory_space<vmem>>, vector<2x100xf32>
    %c0_1 = arith.constant 0 : index
    %c0_2 = arith.constant 0 : index
    %1 = vector.load %arg2[%c0_1, %c0_2] : memref<100x10xf32, #tpu.memory_space<vmem>>, vector<100x10xf32>
    %cst = arith.constant dense<0.000000e+00> : vector<2x10xf32>
    %2 = tpu.matmul %0, %1, %cst {dimension_numbers = #tpu.dot_dimension_numbers<[1], [0], [0], [1], [0, 0, 1, 1], [], []>} : vector<2x100xf32>, vector<100x10xf32>, vector<2x10xf32> -> vector<2x10xf32>
    %c0_3 = arith.constant 0 : index
    %c0_4 = arith.constant 0 : index
    %3 = vector.load %arg3[%c0_3, %c0_4] : memref<1x10xf32, #tpu.memory_space<vmem>>, vector<1x10xf32>
    %4 = vector.broadcast %3 : vector<1x10xf32> to vector<2x10xf32>
    %5 = arith.addf %2, %4 : vector<2x10xf32>
    %c0_5 = arith.constant 0 : index
    %c0_6 = arith.constant 0 : index
    %6 = vector.load %arg4[%c0_5, %c0_6] : memref<2x10xf32, #tpu.memory_space<vmem>>, vector<2x10xf32>
    tpu.vector_store %arg4[%c0_5, %c0_6], %5 {strides = array<i32>} : memref<2x10xf32, #tpu.memory_space<vmem>>, vector<2x10xf32>,
    return
  }
  func.func @transform_0(%arg0: i32) -> (i32, i32) {
    %c0_i32 = arith.constant 0 : i32
    %c0_i32_0 = arith.constant 0 : i32
    return %arg0, %c0_i32 : i32, i32
  }
  func.func @transform_1(%arg0: i32) -> (i32, i32) {
    %c0_i32 = arith.constant 0 : i32
    %c0_i32_0 = arith.constant 0 : i32
    %c0_i32_1 = arith.constant 0 : i32
    return %c0_i32, %c0_i32_0 : i32, i32
  }
  func.func @transform_2(%arg0: i32) -> (i32, i32) {
    %c0_i32 = arith.constant 0 : i32
    %c0_i32_0 = arith.constant 0 : i32
    %c0_i32_1 = arith.constant 0 : i32
    return %c0_i32, %c0_i32_0 : i32, i32
  }
  func.func @transform_3(%arg0: i32) -> (i32, i32) {
    %c0_i32 = arith.constant 0 : i32
    %c0_i32_0 = arith.constant 0 : i32
    return %arg0, %c0_i32 : i32, i32
  }
}

</mosaic_0001>

<llo_original>
// kernel: tpu_custom_call.1
$region0: #{tpu_custom_call.1}
  #allocation0 [shape = 'u32[]', space=smem, size = 0x4, offset = 0x4, fixed_abs, tag = 'smem constant byte address 0x4 - core index']
  #allocation1 [shape = 'u32[144,128]{1,0:T(1,128)}', space=vmem, size = 0x12000, scoped, tag = 'internal scratch']
  %s0 = inlined_call_operand.vmem [shape: f32[2,100], index: 0, kind: input, shape index: {}]
  %s1 = inlined_call_operand.vmem [shape: f32[100,10], index: 1, kind: input, shape index: {}]
  %s2 = inlined_call_operand.vmem [shape: f32[1,10], index: 2, kind: input, shape index: {}]
  %s3 = inlined_call_operand.hbm [shape: f32[2,10], index: 3, kind: output, shape index: {}]
  %s4 = sld [smem:[#allocation0]]
  $region22: #{tpu_custom_call.1} parent=0
    _
  %s6 = ssub.s32 1, %s4
  %s7 = scalar_select 0, %s6, %s4
  $region1: #{tpu_custom_call.1} parent=0
    #allocation2 [shape = 'u8[1024]{0}', space=vmem, size = 0x400, scoped, tag = 'output window, operand 0, single buffered']
    #allocation3 [shape = 's32[1]{0}', space=sflag, size = 0x4, scoped, tag = 'scoped memory for tpu_custom_call.1']
    %8 = vsyncpa [#allocation3], 0
    // Predicated region
    $region2: #{tpu_custom_call.1} parent=1 // pred_check
      _
    $region3: #{tpu_custom_call.1} parent=1 // pred_check_branch
      %10 = sbr.rel (0) target = $region5
    $region4: #{tpu_custom_call.1} parent=1 // pred_region
      _
    $region5: #{tpu_custom_call.1} parent=1 // pred_fallthru
      _
    // Predicated region
    $region6: #{tpu_custom_call.1} parent=1 // pred_check
      _
    $region7: #{tpu_custom_call.1} parent=1 // pred_check_branch
      %12 = sbr.rel (0) target = $region9
    $region8: #{tpu_custom_call.1} parent=1 // pred_region
      _
    $region9: #{tpu_custom_call.1} parent=1 // pred_fallthru
      _
    // Predicated region
    $region10: #{tpu_custom_call.1} parent=1 // pred_check
      _
    $region11: #{tpu_custom_call.1} parent=1 // pred_check_branch
      %14 = sbr.rel (0) target = $region13
    $region12: #{tpu_custom_call.1} parent=1 // pred_region
      _
    $region13: #{tpu_custom_call.1} parent=1 // pred_fallthru
      _
    %v15 = vld [vmem:[%s0] sm:$0x3]
    %v16 = vld [vmem:[%s1] sm:$0xff]
    %v17 = vld [vmem:[%s1 + $0x8] sm:$0xff]
    %v18 = vld [vmem:[%s1 + $0x10] sm:$0xff]
    %v19 = vld [vmem:[%s1 + $0x18] sm:$0xff]
    %v20 = vld [vmem:[%s1 + $0x20] sm:$0xff]
    %v21 = vld [vmem:[%s1 + $0x28] sm:$0xff]
    %v22 = vld [vmem:[%s1 + $0x30] sm:$0xff]
    %v23 = vld [vmem:[%s1 + $0x38] sm:$0xff]
    %v24 = vld [vmem:[%s1 + $0x40] sm:$0xff]
    %v25 = vld [vmem:[%s1 + $0x48] sm:$0xff]
    %v26 = vld [vmem:[%s1 + $0x50] sm:$0xff]
    %v27 = vld [vmem:[%s1 + $0x58] sm:$0xff]
    %v28 = vld [vmem:[%s1 + $0x60] sm:$0xf]
    %v29 = vld [vmem:[%s2] sm:$0x1]
    %v31 = vlaneseq
    %v32 = vshrl.u32 %v31, 7
    %v33 = vsub.s32 0, %v32
    %v34 = vrot.slane %v29, %v33
    %vm36 = vcmask 818176
    %v38 = vsel %vm36, %v15, 0
    %vm40 = vcmask 1043456
    %v42 = vsel %vm40, %v28, 0
    %44 = vmatprep.subr.mxu0 0.0
    %45 = vmatpush1.msra.mxu0 %v16
    %46 = vmatprep.subr.mxu0 0.0
    %47 = vmatpush1.msra.mxu0 %v17
    %48 = vmatprep.subr.mxu0 0.0
    %49 = vmatpush1.msra.mxu0 %v18
    %50 = vmatprep.subr.mxu0 0.0
    %51 = vmatpush1.msra.mxu0 %v19
    %52 = vmatprep.subr.mxu0 0.0
    %53 = vmatpush1.msra.mxu0 %v20
    %54 = vmatprep.subr.mxu0 0.0
    %55 = vmatpush1.msra.mxu0 %v21
    %56 = vmatprep.subr.mxu0 0.0
    %57 = vmatpush1.msra.mxu0 %v22
    %58 = vmatprep.subr.mxu0 0.0
    %59 = vmatpush1.msra.mxu0 %v23
    %60 = vmatprep.subr.mxu0 0.0
    %61 = vmatpush1.msra.mxu0 %v24
    %62 = vmatprep.subr.mxu0 0.0
    %63 = vmatpush1.msra.mxu0 %v25
    %64 = vmatprep.subr.mxu0 0.0
    %65 = vmatpush1.msra.mxu0 %v26
    %66 = vmatprep.subr.mxu0 0.0
    %67 = vmatpush1.msra.mxu0 %v27
    %68 = vmatprep.subr.mxu0 0.0
    %69 = vmatpush1.msra.mxu0 %v42
    %70 = vmatprep.subr.mxu0 0.0
    %71 = vmatpush1.msra.mxu0 0.0
    %72 = vmatprep.subr.mxu0 0.0
    %73 = vmatpush1.msra.mxu0 0.0
    %74 = vmatprep.subr.mxu0 0.0
    %75 = vmatpush1.msra.mxu0 0.0
    %76 = vmatprep.subr.mxu0 0.0
    %77 = vmatpush1.msra.mxu0 0.0
    %78 = vmatprep.subr.mxu0 0.0
    %79 = vmatpush1.msra.mxu0 0.0
    %80 = vmatprep.subr.mxu0 0.0
    %81 = vmatpush1.msra.mxu0 0.0
    %82 = vmatprep.subr.mxu0 0.0
    %83 = vmatpush1.msra.mxu0 0.0
    %84 = vmatprep.subr.mxu0 0.0
    %85 = vmatpush1.msra.mxu0 0.0
    %86 = vmatprep.subr.mxu0 0.0
    %87 = vmatpush1.msra.mxu0 0.0
    %88 = vmatprep.subr.mxu0 0.0
    %89 = vmatpush1.msra.mxu0 0.0
    %90 = vmatprep.subr.mxu0 0.0
    %91 = vmatpush1.msra.mxu0 0.0
    %92 = vmatprep.subr.mxu0 0.0
    %93 = vmatpush1.msra.mxu0 0.0
    %94 = vmatprep.subr.mxu0 0.0
    %95 = vmatpush1.msra.mxu0 0.0
    %96 = vmatprep.subr.mxu0 0.0
    %97 = vmatpush1.msra.mxu0 0.0
    %98 = vmatprep.subr.mxu0 0.0
    %99 = vmatpush1.msra.mxu0 0.0
    %100 = vmatprep.subr.mxu0 0.0
    %101 = vmatpush1.msra.mxu0 0.0
    %102 = vmatprep.subr.mxu0 0.0
    %103 = vmatpush1.msra.mxu0 0.0
    %104 = vmatprep.subr.mxu0 0.0
    %105 = vmatpush1.msra.mxu0 0.0
    %106 = vmatprep.subr.mxu0 0.0
    %107 = vmatpush1.msra.mxu0 0.0
    %108 = vmatprep.mubr.f32.mxu0 0.0
    %109 = vmatmul.mubr.f32.gmra.mrb[0].mxu0 %v38
    %v110 = vpop.f32.mrb[0].mxu0
    %v111 = vadd.f32 %v34, %v110
    %v112 = vpop.f32.mrb[0].mxu0
    %113 = vdwg.mxu0
    %vm114 = vcmask 74752
    %115 = vst.msk [vmem:[#allocation2] sm:$0x3] %vm114, %v111
    // Predicated region
    $region14: #{tpu_custom_call.1} parent=1 // pred_check
      _
    $region15: #{tpu_custom_call.1} parent=1 // pred_check_branch
      %117 = sbr.rel (0) target = $region17
    $region16: #{tpu_custom_call.1} parent=1 // pred_region
      %s119 = ssub.s32 32, 32
      %120 = vsyncadd [#allocation3], %s119
      %s122 = sshll.u32 [#allocation2], 4
      %s123 = int_to_ptr.vmem [resolvable:$true] %s122
      %125 = dma.vmem_to_hbm [thread:$0]  %s123, 32, %s3, [#allocation3]
    $region17: #{tpu_custom_call.1} parent=1 // pred_fallthru
      _
    // Predicated region
    $region18: #{tpu_custom_call.1} parent=1 // pred_check
      _
    $region19: #{tpu_custom_call.1} parent=1 // pred_check_branch
      %127 = sbr.rel (0) target = $region21
    $region20: #{tpu_custom_call.1} parent=1 // pred_region
      %128 = dma.done [#allocation3], 32
    $region21: #{tpu_custom_call.1} parent=1 // pred_fallthru
      _
    %129 = vsyncpa [#allocation3], 1

</llo_original>
